<compile_context>
chip_gen: v7x
topology: tpu7x:2x2x1
jax: 0.10.0
libtpu: 0.0.40
codegen_flags: <defaults>
</compile_context>

<pallas_src>
import jax
import jax.numpy as jnp
from jax.experimental import pallas as pl
from jax.experimental.pallas import tpu as pltpu

_LANE = 128
_TB = 256  # batch tile (lane-axis) when B is large; multiple of 128


# -----------------------------------------------------------------------------
# Fused kernel: dense1 (VPU FMAs) -> relu -> dense2 (MXU) -> relu
#               -> dense3 (sublane reduce) -> tanh, all with B on the lane axis.
# -----------------------------------------------------------------------------
def _actor_kernel(x_ref, p_ref, o_ref):
    IN = x_ref.shape[0]
    H = p_ref.shape[0]

    # Unpack the parameter slab (static column offsets -> cheap lane selects).
    c = 0
    w1 = p_ref[:, c:c + IN]; c += IN          # (H, IN)   PyTorch (out, in)
    b1 = p_ref[:, c:c + 1]; c += 1            # (H, 1)
    w2 = p_ref[:, c:c + H]; c += H            # (H, H)    PyTorch (out, in)
    b2 = p_ref[:, c:c + 1]; c += 1            # (H, 1)
    w3 = p_ref[:, c:c + 1]; c += 1            # (H, 1)    = dense3.weight^T
    b3 = p_ref[0:1, c:c + 1]                  # (1, 1)

    x = x_ref[...]                            # (IN, TB), B on lanes

    # dense1: K = IN (tiny) -> IN broadcast FMAs on the VPU, no MXU round-trip.
    h = w1[:, 0:1] * x[0:1, :]
    for k in range(1, IN):
        h = h + w1[:, k:k + 1] * x[k:k + 1, :]
    h = jnp.maximum(h + b1, 0.0)              # (H, TB)

    # dense2: (H, H) @ (H, TB) on the MXU, f32 accumulation.
    h = jnp.dot(w2, h, preferred_element_type=jnp.float32)
    h = jnp.maximum(h + b2, 0.0)              # (H, TB)

    # dense3 (H -> 1): sublane reduction (XLU) + tanh; lane-dense (1, TB) store.
    o = jnp.sum(w3 * h, axis=0, keepdims=True) + b3
    o_ref[...] = jnp.tanh(o)


def actor_mini_pallas(x_t, packed):
    """x_t: (IN, B) f32 with batch on the lane axis; packed: (H, 128) f32 slab."""
    IN, B = x_t.shape
    H = packed.shape[0]

    if B > _TB:
        # Tile the batch (lane) axis; pad B up to a multiple of the tile.
        bp = pl.cdiv(B, _TB) * _TB
        if bp != B:
            x_t = jnp.pad(x_t, ((0, 0), (0, bp - B)))
        tb, grid_b = _TB, bp // _TB
    else:
        # Single full-array block (block_shape == array shape is always legal).
        bp, tb, grid_b = B, B, 1

    cost = pl.CostEstimate(
        flops=2 * B * (IN * H + H * H + H),
        transcendentals=B,
        bytes_accessed=4 * (IN * B + H * _LANE + B),
    )

    out = pl.pallas_call(
        _actor_kernel,
        out_shape=jax.ShapeDtypeStruct((1, bp), jnp.float32),
        grid=(grid_b,),
        in_specs=[
            pl.BlockSpec((IN, tb), lambda i: (0, i)),       # x tile
            pl.BlockSpec((H, _LANE), lambda i: (0, 0)),     # params, resident
        ],
        out_specs=pl.BlockSpec((1, tb), lambda i: (0, i)),
        compiler_params=pltpu.CompilerParams(
            dimension_semantics=("parallel",)),
        cost_estimate=cost,
    )(x_t, packed)
    return out[:, :B]                                        # (1, B)


# -----------------------------------------------------------------------------
# Parameters: PyTorch fanin_init layout, packed once into one aligned slab.
# -----------------------------------------------------------------------------
def init_params(key, input_size=3, hidden1=64, hidden2=64, output_size=1):
    ks = jax.random.split(key, 6)

    def fanin(k, shape):
        bound = 1.0 / jnp.sqrt(jnp.float32(shape[0]))
        return jax.random.uniform(k, shape, jnp.float32, -bound, bound)

    return {
        "dense1_w": fanin(ks[0], (hidden1, input_size)),   # (out, in) like PyTorch
        "dense1_b": fanin(ks[1], (hidden1,)),
        "dense2_w": fanin(ks[2], (hidden2, hidden1)),
        "dense2_b": fanin(ks[3], (hidden2,)),
        "dense3_w": fanin(ks[4], (output_size, hidden2)),
        "dense3_b": fanin(ks[5], (output_size,)),
    }


def pack_params(params):
    """One-time pack of all weights/biases into a single (H, 128) f32 slab.

    Layout (columns): [W1 (IN) | b1 (1) | W2 (H) | b2 (1) | W3^T (1) | b3 (1)].
    Weights stay in PyTorch (out, in) layout: the kernel computes W @ h with
    batch on the lane axis, so no transposes are needed at call time.
    """
    w1 = jnp.asarray(params["dense1_w"], jnp.float32)   # (H1, IN)
    b1 = jnp.asarray(params["dense1_b"], jnp.float32)
    w2 = jnp.asarray(params["dense2_w"], jnp.float32)   # (H2, H1)
    b2 = jnp.asarray(params["dense2_b"], jnp.float32)
    w3 = jnp.asarray(params["dense3_w"], jnp.float32)   # (1, H2)
    b3 = jnp.asarray(params["dense3_b"], jnp.float32)   # (1,)

    h1, in_sz = w1.shape
    h2 = w2.shape[0]
    assert h1 == h2, "packed layout assumes hidden1 == hidden2"
    assert w3.shape[0] == 1 and b3.shape == (1,)
    ncols = in_sz + 1 + h1 + 1 + 1 + 1
    assert ncols <= _LANE, "parameter slab does not fit in 128 lanes"
    assert h1 % 8 == 0, "hidden size must be a multiple of 8 for the slab"

    slab = jnp.zeros((h1, _LANE), jnp.float32)
    c = 0
    slab = slab.at[:, c:c + in_sz].set(w1); c += in_sz
    slab = slab.at[:, c:c + 1].set(b1[:, None]); c += 1
    slab = slab.at[:, c:c + h1].set(w2); c += h1
    slab = slab.at[:, c:c + 1].set(b2[:, None]); c += 1
    slab = slab.at[:, c:c + 1].set(w3.T); c += 1
    slab = slab.at[0:1, c:c + 1].set(b3[:, None])
    return slab


@jax.jit
def actor_mini_forward(x, packed):
    """x: (B, input_size) (or anything reshapable, mirrors x.view(B, 1, -1)).
    packed: pre-packed parameter slab from pack_params().

    Returns (B, 1, output_size) float32, matching the PyTorch module
    (default norm=False path).
    """
    # TODO(synk): norm=True branch (BatchNorm1d over (B,1,F)) not implemented;
    # the module's default construction uses norm=False.
    B = x.shape[0]
    x_t = x.reshape(B, -1).T.astype(jnp.float32)   # (IN, B): batch on lanes
    out = actor_mini_pallas(x_t, packed)           # (1, B)
    return out[0].reshape(B, 1, 1)


# -----------------------------------------------------------------------------
# Pure-JAX reference (correctness check only)
# -----------------------------------------------------------------------------
def ref_forward(x, params):
    B = x.shape[0]
    h = x.reshape(B, 1, -1)
    h = jnp.maximum(h @ params["dense1_w"].T + params["dense1_b"], 0.0)
    h = jnp.maximum(h @ params["dense2_w"].T + params["dense2_b"], 0.0)
    o = h @ params["dense3_w"].T + params["dense3_b"]
    return jnp.tanh(o)  # (B, 1, 1)


if __name__ == "__main__":
    key = jax.random.PRNGKey(0)
    k_x, k_p = jax.random.split(key)

    B, INPUT_SIZE = 2, 3
    x = jax.random.normal(k_x, (B, INPUT_SIZE), dtype=jnp.float32)
    params = init_params(k_p, input_size=INPUT_SIZE, hidden1=64, hidden2=64,
                         output_size=1)
    packed = pack_params(params)   # one-time pack; reused across all calls

    out = actor_mini_forward(x, packed)
    out = jax.block_until_ready(out)

    ref = ref_forward(x, params)
    assert out.shape == (B, 1, 1), out.shape
    assert jnp.allclose(out, ref, atol=1e-5, rtol=1e-5), (out, ref)

    print("KERNEL_OK")
</pallas_src>

<mosaic_0001>
module attributes {stable_mosaic.version = 11 : i64} {
  func.func @_actor_kernel(%arg0: i32, %arg1: memref<3x2xf32, #tpu.memory_space<vmem>>, %arg2: memref<64x128xf32, #tpu.memory_space<vmem>>, %arg3: memref<1x2xf32, #tpu.memory_space<vmem>>) attributes {dimension_semantics = [#tpu.dimension_semantics<parallel>], iteration_bounds = array<i64: 1>, scalar_prefetch = 0 : i64, scratch_operands = 0 : i64, tpu.core_type = #tpu.core_type<tc>, window_params = [{transform_indices = @transform_0, window_bounds = array<i64: 3, 2>}, {pipeline_mode = #tpu.pipeline_mode<synchronous>, transform_indices = @transform_1, window_bounds = array<i64: 64, 128>}, {transform_indices = @transform_2, window_bounds = array<i64: 1, 2>}]} {
    %c0 = arith.constant 0 : index
    %c0_0 = arith.constant 0 : index
    %0 = vector.load %arg2[%c0, %c0_0] : memref<64x128xf32, #tpu.memory_space<vmem>>, vector<64x3xf32>
    %c0_1 = arith.constant 0 : index
    %c3 = arith.constant 3 : index
    %1 = vector.load %arg2[%c0_1, %c3] : memref<64x128xf32, #tpu.memory_space<vmem>>, vector<64x1xf32>
    %c0_2 = arith.constant 0 : index
    %c4 = arith.constant 4 : index
    %2 = vector.load %arg2[%c0_2, %c4] : memref<64x128xf32, #tpu.memory_space<vmem>>, vector<64x64xf32>
    %c0_3 = arith.constant 0 : index
    %c68 = arith.constant 68 : index
    %3 = vector.load %arg2[%c0_3, %c68] : memref<64x128xf32, #tpu.memory_space<vmem>>, vector<64x1xf32>
    %c0_4 = arith.constant 0 : index
    %c69 = arith.constant 69 : index
    %4 = vector.load %arg2[%c0_4, %c69] : memref<64x128xf32, #tpu.memory_space<vmem>>, vector<64x1xf32>
    %c0_5 = arith.constant 0 : index
    %c70 = arith.constant 70 : index
    %5 = vector.load %arg2[%c0_5, %c70] : memref<64x128xf32, #tpu.memory_space<vmem>>, vector<1x1xf32>
    %c0_6 = arith.constant 0 : index
    %c0_7 = arith.constant 0 : index
    %6 = vector.load %arg1[%c0_6, %c0_7] : memref<3x2xf32, #tpu.memory_space<vmem>>, vector<3x2xf32>
    %7 = vector.extract_strided_slice %0 {offsets = [0, 0], sizes = [64, 1], strides = [1, 1]} : vector<64x3xf32> to vector<64x1xf32>
    %8 = vector.extract_strided_slice %6 {offsets = [0, 0], sizes = [1, 2], strides = [1, 1]} : vector<3x2xf32> to vector<1x2xf32>
    %9 = vector.broadcast %7 : vector<64x1xf32> to vector<64x2xf32>
    %10 = vector.broadcast %8 : vector<1x2xf32> to vector<64x2xf32>
    %11 = arith.mulf %9, %10 : vector<64x2xf32>
    %12 = vector.extract_strided_slice %0 {offsets = [0, 1], sizes = [64, 1], strides = [1, 1]} : vector<64x3xf32> to vector<64x1xf32>
    %13 = vector.extract_strided_slice %6 {offsets = [1, 0], sizes = [1, 2], strides = [1, 1]} : vector<3x2xf32> to vector<1x2xf32>
    %14 = vector.broadcast %12 : vector<64x1xf32> to vector<64x2xf32>
    %15 = vector.broadcast %13 : vector<1x2xf32> to vector<64x2xf32>
    %16 = arith.mulf %14, %15 : vector<64x2xf32>
    %17 = arith.addf %11, %16 : vector<64x2xf32>
    %18 = vector.extract_strided_slice %0 {offsets = [0, 2], sizes = [64, 1], strides = [1, 1]} : vector<64x3xf32> to vector<64x1xf32>
    %19 = vector.extract_strided_slice %6 {offsets = [2, 0], sizes = [1, 2], strides = [1, 1]} : vector<3x2xf32> to vector<1x2xf32>
    %20 = vector.broadcast %18 : vector<64x1xf32> to vector<64x2xf32>
    %21 = vector.broadcast %19 : vector<1x2xf32> to vector<64x2xf32>
    %22 = arith.mulf %20, %21 : vector<64x2xf32>
    %23 = arith.addf %17, %22 : vector<64x2xf32>
    %24 = vector.broadcast %1 : vector<64x1xf32> to vector<64x2xf32>
    %25 = arith.addf %23, %24 : vector<64x2xf32>
    %cst = arith.constant 0.000000e+00 : f32
    %26 = vector.broadcast %cst : f32 to vector<64x2xf32>
    %27 = arith.maximumf %25, %26 : vector<64x2xf32>
    %cst_8 = arith.constant dense<0.000000e+00> : vector<64x2xf32>
    %28 = tpu.matmul %2, %27, %cst_8 {dimension_numbers = #tpu.dot_dimension_numbers<[1], [0], [0], [1], [0, 0, 1, 1], [], []>} : vector<64x64xf32>, vector<64x2xf32>, vector<64x2xf32> -> vector<64x2xf32>
    %29 = vector.broadcast %3 : vector<64x1xf32> to vector<64x2xf32>
    %30 = arith.addf %28, %29 : vector<64x2xf32>
    %cst_9 = arith.constant 0.000000e+00 : f32
    %31 = vector.broadcast %cst_9 : f32 to vector<64x2xf32>
    %32 = arith.maximumf %30, %31 : vector<64x2xf32>
    %33 = vector.broadcast %4 : vector<64x1xf32> to vector<64x2xf32>
    %34 = arith.mulf %33, %32 : vector<64x2xf32>
    %cst_10 = arith.constant dense<0.000000e+00> : vector<2xf32>
    %35 = vector.multi_reduction <add>, %34, %cst_10 [0] : vector<64x2xf32> to vector<2xf32>
    %36 = vector.shape_cast %35 : vector<2xf32> to vector<1x2xf32>
    %37 = vector.broadcast %5 : vector<1x1xf32> to vector<1x2xf32>
    %38 = arith.addf %36, %37 : vector<1x2xf32>
    %39 = math.tanh %38 : vector<1x2xf32>
    %c0_11 = arith.constant 0 : index
    %c0_12 = arith.constant 0 : index
    %40 = vector.load %arg3[%c0_11, %c0_12] : memref<1x2xf32, #tpu.memory_space<vmem>>, vector<1x2xf32>
    tpu.vector_store %arg3[%c0_11, %c0_12], %39 {strides = array<i32>} : memref<1x2xf32, #tpu.memory_space<vmem>>, vector<1x2xf32>,
    return
  }
  func.func @transform_0(%arg0: i32) -> (i32, i32) {
    %c0_i32 = arith.constant 0 : i32
    %c0_i32_0 = arith.constant 0 : i32
    return %c0_i32, %arg0 : i32, i32
  }
  func.func @transform_1(%arg0: i32) -> (i32, i32) {
    %c0_i32 = arith.constant 0 : i32
    %c0_i32_0 = arith.constant 0 : i32
    %c0_i32_1 = arith.constant 0 : i32
    return %c0_i32, %c0_i32_0 : i32, i32
  }
  func.func @transform_2(%arg0: i32) -> (i32, i32) {
    %c0_i32 = arith.constant 0 : i32
    %c0_i32_0 = arith.constant 0 : i32
    return %c0_i32, %arg0 : i32, i32
  }
}

</mosaic_0001>

<llo_original>
// kernel: actor_mini_forward.1
$region0: #{actor_mini_forward.1}
  #allocation0 [shape = 'u32[]', space=smem, size = 0x4, offset = 0x4, fixed_abs, tag = 'smem constant byte address 0x4 - core index']
  #allocation1 [shape = 'u32[144,128]{1,0:T(1,128)}', space=vmem, size = 0x12000, scoped, tag = 'internal scratch']
  %s0 = inlined_call_operand.vmem [shape: f32[3,2], index: 0, kind: input, shape index: {}]
  %s1 = inlined_call_operand.hbm [shape: f32[64,128], index: 1, kind: input, shape index: {}]
  %s2 = inlined_call_operand.hbm [shape: f32[1,2], index: 2, kind: output, shape index: {}]
  %s3 = sld [smem:[#allocation0]]
  $region22: #{actor_mini_forward.1} parent=0
    _
  %s5 = ssub.s32 1, %s3
  %s6 = scalar_select 0, %s5, %s3
  $region1: #{actor_mini_forward.1} parent=0
    #allocation2 [shape = 'u8[32768]{0}', space=vmem, size = 0x8000, scoped, tag = 'input window, operand 1, single buffered']
    #allocation3 [shape = 's32[1]{0}', space=sflag, size = 0x4, scoped, tag = 'scoped memory for actor_mini_forward.1']
    #allocation4 [shape = 's32[1]{0}', space=sflag, size = 0x4, scoped, tag = 'scoped memory for actor_mini_forward.1']
    #allocation5 [shape = 'u8[512]{0}', space=vmem, size = 0x400, scoped, tag = 'output window, operand 0, single buffered']
    %7 = vsyncpa [#allocation3], 0
    %8 = vsyncpa [#allocation4], 0
    // Predicated region
    $region2: #{actor_mini_forward.1} parent=1 // pred_check
      _
    $region3: #{actor_mini_forward.1} parent=1 // pred_check_branch
      %10 = sbr.rel (0) target = $region5
    $region4: #{actor_mini_forward.1} parent=1 // pred_region
      _
    $region5: #{actor_mini_forward.1} parent=1 // pred_fallthru
      _
    // Predicated region
    $region6: #{actor_mini_forward.1} parent=1 // pred_check
      _
    $region7: #{actor_mini_forward.1} parent=1 // pred_check_branch
      %12 = sbr.rel (0) target = $region9
    $region8: #{actor_mini_forward.1} parent=1 // pred_region
      %s14 = ssub.s32 1024, 1024
      %15 = vsyncadd [#allocation3], %s14
      %s16 = sshll.u32 [#allocation2], 4
      %s17 = int_to_ptr.vmem [resolvable:$true] %s16
      %22 = dma.hbm_to_vmem [thread:$0]  %s1, 1024, %s17, [#allocation3], 128, 128, 8
    $region9: #{actor_mini_forward.1} parent=1 // pred_fallthru
      _
    // Predicated region
    $region10: #{actor_mini_forward.1} parent=1 // pred_check
      _
    $region11: #{actor_mini_forward.1} parent=1 // pred_check_branch
      %24 = sbr.rel (0) target = $region13
    $region12: #{actor_mini_forward.1} parent=1 // pred_region
      %25 = dma.done [#allocation3], 1024
    $region13: #{actor_mini_forward.1} parent=1 // pred_fallthru
      _
    %v26 = vld [vmem:[#allocation2] sm:$0xff]
    %v27 = vld [vmem:[#allocation2 + $0x8] sm:$0xff]
    %v28 = vld [vmem:[#allocation2 + $0x10] sm:$0xff]
    %v29 = vld [vmem:[#allocation2 + $0x18] sm:$0xff]
    %v30 = vld [vmem:[#allocation2 + $0x20] sm:$0xff]
    %v31 = vld [vmem:[#allocation2 + $0x28] sm:$0xff]
    %v32 = vld [vmem:[#allocation2 + $0x30] sm:$0xff]
    %v33 = vld [vmem:[#allocation2 + $0x38] sm:$0xff]
    %v34 = vld [vmem:[#allocation2] sm:$0x1]
    %v35 = vld [vmem:[%s0] sm:$0x7]
    %37 = vset.pattern.permute.xlu0 0
    %38 = vperm.xlu0 %37, %v26
    %v39 = vpop.permute.xlu0 %38
    %42 = vset.pattern.permute.xlu0 0
    %43 = vperm.xlu0 %42, %v27
    %v44 = vpop.permute.xlu0 %43
    %47 = vset.pattern.permute.xlu0 0
    %48 = vperm.xlu0 %47, %v28
    %v49 = vpop.permute.xlu0 %48
    %52 = vset.pattern.permute.xlu0 0
    %53 = vperm.xlu0 %52, %v29
    %v54 = vpop.permute.xlu0 %53
    %57 = vset.pattern.permute.xlu0 0
    %58 = vperm.xlu0 %57, %v30
    %v59 = vpop.permute.xlu0 %58
    %62 = vset.pattern.permute.xlu0 0
    %63 = vperm.xlu0 %62, %v31
    %v64 = vpop.permute.xlu0 %63
    %67 = vset.pattern.permute.xlu0 0
    %68 = vperm.xlu0 %67, %v32
    %v69 = vpop.permute.xlu0 %68
    %72 = vset.pattern.permute.xlu0 0
    %73 = vperm.xlu0 %72, %v33
    %v74 = vpop.permute.xlu0 %73
    %v76 = vlaneseq
    %v77 = vshrl.u32 %v76, 7
    %v78 = vsub.s32 0, %v77
    %v79 = vrot.slane %v35, %v78
    %v80 = vmul.f32 %v39, %v79
    %v81 = vmul.f32 %v44, %v79
    %v82 = vmul.f32 %v49, %v79
    %v83 = vmul.f32 %v54, %v79
    %v84 = vmul.f32 %v59, %v79
    %v85 = vmul.f32 %v64, %v79
    %v86 = vmul.f32 %v69, %v79
    %v87 = vmul.f32 %v74, %v79
    %88 = vset.pattern.permute.xlu0 1
    %89 = vperm.xlu0 %88, %v26
    %v90 = vpop.permute.xlu0 %89
    %92 = vset.pattern.permute.xlu0 1
    %93 = vperm.xlu0 %92, %v27
    %v94 = vpop.permute.xlu0 %93
    %96 = vset.pattern.permute.xlu0 1
    %97 = vperm.xlu0 %96, %v28
    %v98 = vpop.permute.xlu0 %97
    %100 = vset.pattern.permute.xlu0 1
    %101 = vperm.xlu0 %100, %v29
    %v102 = vpop.permute.xlu0 %101
    %104 = vset.pattern.permute.xlu0 1
    %105 = vperm.xlu0 %104, %v30
    %v106 = vpop.permute.xlu0 %105
    %108 = vset.pattern.permute.xlu0 1
    %109 = vperm.xlu0 %108, %v31
    %v110 = vpop.permute.xlu0 %109
    %112 = vset.pattern.permute.xlu0 1
    %113 = vperm.xlu0 %112, %v32
    %v114 = vpop.permute.xlu0 %113
    %116 = vset.pattern.permute.xlu0 1
    %117 = vperm.xlu0 %116, %v33
    %v118 = vpop.permute.xlu0 %117
    %v120 = vlaneseq
    %v121 = vshrl.u32 %v120, 7
    %v122 = vsub.s32 1, %v121
    %v123 = vrot.slane %v35, %v122
    %v124 = vmul.f32 %v90, %v123
    %v125 = vmul.f32 %v94, %v123
    %v126 = vmul.f32 %v98, %v123
    %v127 = vmul.f32 %v102, %v123
    %v128 = vmul.f32 %v106, %v123
    %v129 = vmul.f32 %v110, %v123
    %v130 = vmul.f32 %v114, %v123
    %v131 = vmul.f32 %v118, %v123
    %v132 = vadd.f32 %v80, %v124
    %v133 = vadd.f32 %v81, %v125
    %v134 = vadd.f32 %v82, %v126
    %v135 = vadd.f32 %v83, %v127
    %v136 = vadd.f32 %v84, %v128
    %v137 = vadd.f32 %v85, %v129
    %v138 = vadd.f32 %v86, %v130
    %v139 = vadd.f32 %v87, %v131
    %140 = vset.pattern.permute.xlu0 2
    %141 = vperm.xlu0 %140, %v26
    %v142 = vpop.permute.xlu0 %141
    %144 = vset.pattern.permute.xlu0 2
    %145 = vperm.xlu0 %144, %v27
    %v146 = vpop.permute.xlu0 %145
    %148 = vset.pattern.permute.xlu0 2
    %149 = vperm.xlu0 %148, %v28
    %v150 = vpop.permute.xlu0 %149
    %152 = vset.pattern.permute.xlu0 2
    %153 = vperm.xlu0 %152, %v29
    %v154 = vpop.permute.xlu0 %153
    %156 = vset.pattern.permute.xlu0 2
    %157 = vperm.xlu0 %156, %v30
    %v158 = vpop.permute.xlu0 %157
    %160 = vset.pattern.permute.xlu0 2
    %161 = vperm.xlu0 %160, %v31
    %v162 = vpop.permute.xlu0 %161
    %164 = vset.pattern.permute.xlu0 2
    %165 = vperm.xlu0 %164, %v32
    %v166 = vpop.permute.xlu0 %165
    %168 = vset.pattern.permute.xlu0 2
    %169 = vperm.xlu0 %168, %v33
    %v170 = vpop.permute.xlu0 %169
    %v172 = vlaneseq
    %v173 = vshrl.u32 %v172, 7
    %v174 = vsub.s32 2, %v173
    %v175 = vrot.slane %v35, %v174
    %v176 = vmul.f32 %v142, %v175
    %v177 = vmul.f32 %v146, %v175
    %v178 = vmul.f32 %v150, %v175
    %v179 = vmul.f32 %v154, %v175
    %v180 = vmul.f32 %v158, %v175
    %v181 = vmul.f32 %v162, %v175
    %v182 = vmul.f32 %v166, %v175
    %v183 = vmul.f32 %v170, %v175
    %v184 = vadd.f32 %v132, %v176
    %v185 = vadd.f32 %v133, %v177
    %v186 = vadd.f32 %v134, %v178
    %v187 = vadd.f32 %v135, %v179
    %v188 = vadd.f32 %v136, %v180
    %v189 = vadd.f32 %v137, %v181
    %v190 = vadd.f32 %v138, %v182
    %v191 = vadd.f32 %v139, %v183
    %192 = vset.pattern.permute.xlu0 3
    %193 = vperm.xlu0 %192, %v26
    %v194 = vpop.permute.xlu0 %193
    %196 = vset.pattern.permute.xlu0 3
    %197 = vperm.xlu0 %196, %v27
    %v198 = vpop.permute.xlu0 %197
    %200 = vset.pattern.permute.xlu0 3
    %201 = vperm.xlu0 %200, %v28
    %v202 = vpop.permute.xlu0 %201
    %204 = vset.pattern.permute.xlu0 3
    %205 = vperm.xlu0 %204, %v29
    %v206 = vpop.permute.xlu0 %205
    %208 = vset.pattern.permute.xlu0 3
    %209 = vperm.xlu0 %208, %v30
    %v210 = vpop.permute.xlu0 %209
    %212 = vset.pattern.permute.xlu0 3
    %213 = vperm.xlu0 %212, %v31
    %v214 = vpop.permute.xlu0 %213
    %216 = vset.pattern.permute.xlu0 3
    %217 = vperm.xlu0 %216, %v32
    %v218 = vpop.permute.xlu0 %217
    %220 = vset.pattern.permute.xlu0 3
    %221 = vperm.xlu0 %220, %v33
    %v222 = vpop.permute.xlu0 %221
    %v224 = vadd.f32 %v184, %v194
    %v225 = vadd.f32 %v185, %v198
    %v226 = vadd.f32 %v186, %v202
    %v227 = vadd.f32 %v187, %v206
    %v228 = vadd.f32 %v188, %v210
    %v229 = vadd.f32 %v189, %v214
    %v230 = vadd.f32 %v190, %v218
    %v231 = vadd.f32 %v191, %v222
    %v232 = vmax.f32 %v224, 0.0
    %v233 = vmax.f32 %v225, 0.0
    %v234 = vmax.f32 %v226, 0.0
    %v235 = vmax.f32 %v227, 0.0
    %v236 = vmax.f32 %v228, 0.0
    %v237 = vmax.f32 %v229, 0.0
    %v238 = vmax.f32 %v230, 0.0
    %v239 = vmax.f32 %v231, 0.0
    %240 = vset.pattern.permute.xlu0 68
    %241 = vperm.xlu0 %240, %v26
    %v242 = vpop.permute.xlu0 %241
    %244 = vset.pattern.permute.xlu0 68
    %245 = vperm.xlu0 %244, %v27
    %v246 = vpop.permute.xlu0 %245
    %248 = vset.pattern.permute.xlu0 68
    %249 = vperm.xlu0 %248, %v28
    %v250 = vpop.permute.xlu0 %249
    %252 = vset.pattern.permute.xlu0 68
    %253 = vperm.xlu0 %252, %v29
    %v254 = vpop.permute.xlu0 %253
    %256 = vset.pattern.permute.xlu0 68
    %257 = vperm.xlu0 %256, %v30
    %v258 = vpop.permute.xlu0 %257
    %260 = vset.pattern.permute.xlu0 68
    %261 = vperm.xlu0 %260, %v31
    %v262 = vpop.permute.xlu0 %261
    %264 = vset.pattern.permute.xlu0 68
    %265 = vperm.xlu0 %264, %v32
    %v266 = vpop.permute.xlu0 %265
    %268 = vset.pattern.permute.xlu0 68
    %269 = vperm.xlu0 %268, %v33
    %v270 = vpop.permute.xlu0 %269
    %272 = vrot.lane.b32.xlu0 %v26, 124
    %v273 = vpop.permute.xlu0 %272
    %274 = vrot.lane.b32.xlu0 %v27, 124
    %v275 = vpop.permute.xlu0 %274
    %276 = vrot.lane.b32.xlu0 %v28, 124
    %v277 = vpop.permute.xlu0 %276
    %278 = vrot.lane.b32.xlu0 %v29, 124
    %v279 = vpop.permute.xlu0 %278
    %280 = vrot.lane.b32.xlu0 %v30, 124
    %v281 = vpop.permute.xlu0 %280
    %282 = vrot.lane.b32.xlu0 %v31, 124
    %v283 = vpop.permute.xlu0 %282
    %284 = vrot.lane.b32.xlu0 %v32, 124
    %v285 = vpop.permute.xlu0 %284
    %286 = vrot.lane.b32.xlu0 %v33, 124
    %v287 = vpop.permute.xlu0 %286
    %vm288 = vcmask 523264
    %v289 = vsel %vm288, %v273, 0
    %v291 = vsel %vm288, %v275, 0
    %v293 = vsel %vm288, %v277, 0
    %v295 = vsel %vm288, %v279, 0
    %v297 = vsel %vm288, %v281, 0
    %v299 = vsel %vm288, %v283, 0
    %v301 = vsel %vm288, %v285, 0
    %v303 = vsel %vm288, %v287, 0
    %305 = vmatprep.subr.mxu0 0.0
    %306 = vmatpush1.msra.mxu0 %v232
    %307 = vmatprep.subr.mxu0 0.0
    %308 = vmatpush1.msra.mxu0 %v233
    %309 = vmatprep.subr.mxu0 0.0
    %310 = vmatpush1.msra.mxu0 %v234
    %311 = vmatprep.subr.mxu0 0.0
    %312 = vmatpush1.msra.mxu0 %v235
    %313 = vmatprep.subr.mxu0 0.0
    %314 = vmatpush1.msra.mxu0 %v236
    %315 = vmatprep.subr.mxu0 0.0
    %316 = vmatpush1.msra.mxu0 %v237
    %317 = vmatprep.subr.mxu0 0.0
    %318 = vmatpush1.msra.mxu0 %v238
    %319 = vmatprep.subr.mxu0 0.0
    %320 = vmatpush1.msra.mxu0 %v239
    %321 = vmatprep.subr.mxu0 0.0
    %322 = vmatpush1.msra.mxu0 0.0
    %323 = vmatprep.subr.mxu0 0.0
    %324 = vmatpush1.msra.mxu0 0.0
    %325 = vmatprep.subr.mxu0 0.0
    %326 = vmatpush1.msra.mxu0 0.0
    %327 = vmatprep.subr.mxu0 0.0
    %328 = vmatpush1.msra.mxu0 0.0
    %329 = vmatprep.subr.mxu0 0.0
    %330 = vmatpush1.msra.mxu0 0.0
    %331 = vmatprep.subr.mxu0 0.0
    %332 = vmatpush1.msra.mxu0 0.0
    %333 = vmatprep.subr.mxu0 0.0
    %334 = vmatpush1.msra.mxu0 0.0
    %335 = vmatprep.subr.mxu0 0.0
    %336 = vmatpush1.msra.mxu0 0.0
    %337 = vmatprep.subr.mxu0 0.0
    %338 = vmatpush1.msra.mxu0 0.0
    %339 = vmatprep.subr.mxu0 0.0
    %340 = vmatpush1.msra.mxu0 0.0
    %341 = vmatprep.subr.mxu0 0.0
    %342 = vmatpush1.msra.mxu0 0.0
    %343 = vmatprep.subr.mxu0 0.0
    %344 = vmatpush1.msra.mxu0 0.0
    %345 = vmatprep.subr.mxu0 0.0
    %346 = vmatpush1.msra.mxu0 0.0
    %347 = vmatprep.subr.mxu0 0.0
    %348 = vmatpush1.msra.mxu0 0.0
    %349 = vmatprep.subr.mxu0 0.0
    %350 = vmatpush1.msra.mxu0 0.0
    %351 = vmatprep.subr.mxu0 0.0
    %352 = vmatpush1.msra.mxu0 0.0
    %353 = vmatprep.subr.mxu0 0.0
    %354 = vmatpush1.msra.mxu0 0.0
    %355 = vmatprep.subr.mxu0 0.0
    %356 = vmatpush1.msra.mxu0 0.0
    %357 = vmatprep.subr.mxu0 0.0
    %358 = vmatpush1.msra.mxu0 0.0
    %359 = vmatprep.subr.mxu0 0.0
    %360 = vmatpush1.msra.mxu0 0.0
    %361 = vmatprep.subr.mxu0 0.0
    %362 = vmatpush1.msra.mxu0 0.0
    %363 = vmatprep.subr.mxu0 0.0
    %364 = vmatpush1.msra.mxu0 0.0
    %365 = vmatprep.subr.mxu0 0.0
    %366 = vmatpush1.msra.mxu0 0.0
    %367 = vmatprep.subr.mxu0 0.0
    %368 = vmatpush1.msra.mxu0 0.0
    %369 = vmatprep.mubr.f32.mxu0 0.0
    %370 = vmatmul.mubr.f32.gmra.mrb[0].mxu0 %v289
    %v371 = vpop.f32.mrb[0].mxu0
    %v372 = vadd.f32 %v242, %v371
    %v373 = vpop.f32.mrb[0].mxu0
    %374 = vmatprep.mubr.f32.mxu0 0.0
    %375 = vmatmul.mubr.f32.gmra.mrb[0].mxu0 %v291
    %v376 = vpop.f32.mrb[0].mxu0
    %v377 = vadd.f32 %v246, %v376
    %v378 = vpop.f32.mrb[0].mxu0
    %379 = vmatprep.mubr.f32.mxu0 0.0
    %380 = vmatmul.mubr.f32.gmra.mrb[0].mxu0 %v293
    %v381 = vpop.f32.mrb[0].mxu0
    %v382 = vadd.f32 %v250, %v381
    %v383 = vpop.f32.mrb[0].mxu0
    %384 = vmatprep.mubr.f32.mxu0 0.0
    %385 = vmatmul.mubr.f32.gmra.mrb[0].mxu0 %v295
    %v386 = vpop.f32.mrb[0].mxu0
    %v387 = vadd.f32 %v254, %v386
    %v388 = vpop.f32.mrb[0].mxu0
    %389 = vmatprep.mubr.f32.mxu0 0.0
    %390 = vmatmul.mubr.f32.gmra.mrb[0].mxu0 %v297
    %v391 = vpop.f32.mrb[0].mxu0
    %v392 = vadd.f32 %v258, %v391
    %v393 = vpop.f32.mrb[0].mxu0
    %394 = vmatprep.mubr.f32.mxu0 0.0
    %395 = vmatmul.mubr.f32.gmra.mrb[0].mxu0 %v299
    %v396 = vpop.f32.mrb[0].mxu0
    %v397 = vadd.f32 %v262, %v396
    %v398 = vpop.f32.mrb[0].mxu0
    %399 = vmatprep.mubr.f32.mxu0 0.0
    %400 = vmatmul.mubr.f32.gmra.mrb[0].mxu0 %v301
    %v401 = vpop.f32.mrb[0].mxu0
    %v402 = vadd.f32 %v266, %v401
    %v403 = vpop.f32.mrb[0].mxu0
    %404 = vmatprep.mubr.f32.mxu0 0.0
    %405 = vmatmul.mubr.f32.gmra.mrb[0].mxu0 %v303
    %v406 = vpop.f32.mrb[0].mxu0
    %v407 = vadd.f32 %v270, %v406
    %v408 = vpop.f32.mrb[0].mxu0
    %409 = vdwg.mxu0
    %v410 = vmax.f32 %v372, 0.0
    %v411 = vmax.f32 %v377, 0.0
    %v412 = vmax.f32 %v382, 0.0
    %v413 = vmax.f32 %v387, 0.0
    %v414 = vmax.f32 %v392, 0.0
    %v415 = vmax.f32 %v397, 0.0
    %v416 = vmax.f32 %v402, 0.0
    %v417 = vmax.f32 %v407, 0.0
    %418 = vset.pattern.permute.xlu0 69
    %419 = vperm.xlu0 %418, %v26
    %v420 = vpop.permute.xlu0 %419
    %422 = vset.pattern.permute.xlu0 69
    %423 = vperm.xlu0 %422, %v27
    %v424 = vpop.permute.xlu0 %423
    %426 = vset.pattern.permute.xlu0 69
    %427 = vperm.xlu0 %426, %v28
    %v428 = vpop.permute.xlu0 %427
    %430 = vset.pattern.permute.xlu0 69
    %431 = vperm.xlu0 %430, %v29
    %v432 = vpop.permute.xlu0 %431
    %434 = vset.pattern.permute.xlu0 69
    %435 = vperm.xlu0 %434, %v30
    %v436 = vpop.permute.xlu0 %435
    %438 = vset.pattern.permute.xlu0 69
    %439 = vperm.xlu0 %438, %v31
    %v440 = vpop.permute.xlu0 %439
    %442 = vset.pattern.permute.xlu0 69
    %443 = vperm.xlu0 %442, %v32
    %v444 = vpop.permute.xlu0 %443
    %446 = vset.pattern.permute.xlu0 69
    %447 = vperm.xlu0 %446, %v33
    %v448 = vpop.permute.xlu0 %447
    %v450 = vmul.f32 %v420, %v410
    %v451 = vmul.f32 %v424, %v411
    %v452 = vmul.f32 %v428, %v412
    %v453 = vmul.f32 %v432, %v413
    %v454 = vmul.f32 %v436, %v414
    %v455 = vmul.f32 %v440, %v415
    %v456 = vmul.f32 %v444, %v416
    %v457 = vmul.f32 %v448, %v417
    %vm458 = vcmask 15360
    %v459 = vsel %vm458, %v450, 0.0
    %v460 = vsel %vm458, %v451, 0.0
    %v461 = vadd.f32 %v459, %v460
    %v462 = vsel %vm458, %v452, 0.0
    %v463 = vadd.f32 %v461, %v462
    %v464 = vsel %vm458, %v453, 0.0
    %v465 = vadd.f32 %v463, %v464
    %v466 = vsel %vm458, %v454, 0.0
    %v467 = vadd.f32 %v465, %v466
    %v468 = vsel %vm458, %v455, 0.0
    %v469 = vadd.f32 %v467, %v468
    %v470 = vsel %vm458, %v456, 0.0
    %v471 = vadd.f32 %v469, %v470
    %v472 = vsel %vm458, %v457, 0.0
    %v473 = vadd.f32 %v471, %v472
    %v474 = vrot.slane %v473, 4
    %v475 = vadd.f32 %v473, %v474
    %v476 = vrot.slane %v475, 2
    %v477 = vadd.f32 %v475, %v476
    %v478 = vrot.slane %v477, 1
    %v479 = vadd.f32 %v477, %v478
    %481 = vset.pattern.permute.xlu0 70
    %482 = vperm.xlu0 %481, %v34
    %v483 = vpop.permute.xlu0 %482
    %v485 = vadd.f32 %v479, %v483
    %v486 = vtanh.pop %v485
    %vm487 = vcmask 8192
    %488 = vst.msk [vmem:[#allocation5] sm:$0x1] %vm487, %v486
    // Predicated region
    $region14: #{actor_mini_forward.1} parent=1 // pred_check
      _
    $region15: #{actor_mini_forward.1} parent=1 // pred_check_branch
      %490 = sbr.rel (0) target = $region17
    $region16: #{actor_mini_forward.1} parent=1 // pred_region
      %s492 = ssub.s32 16, 16
      %493 = vsyncadd [#allocation4], %s492
      %s495 = sshll.u32 [#allocation5], 4
      %s496 = int_to_ptr.vmem [resolvable:$true] %s495
      %498 = dma.vmem_to_hbm [thread:$0]  %s496, 16, %s2, [#allocation4]
    $region17: #{actor_mini_forward.1} parent=1 // pred_fallthru
      _
    // Predicated region
    $region18: #{actor_mini_forward.1} parent=1 // pred_check
      _
    $region19: #{actor_mini_forward.1} parent=1 // pred_check_branch
      %500 = sbr.rel (0) target = $region21
    $region20: #{actor_mini_forward.1} parent=1 // pred_region
      %501 = dma.done [#allocation4], 16
    $region21: #{actor_mini_forward.1} parent=1 // pred_fallthru
      _
    %502 = vsyncpa [#allocation3], 1
    %503 = vsyncpa [#allocation4], 1

</llo_original>
